<compile_context>
chip_gen: v6e
topology: v6e:2x2x1
jax: 0.10.0
libtpu: 0.0.40
codegen_flags: <defaults>
</compile_context>

<pallas_src>
import jax
import jax.numpy as jnp
from jax.experimental import pallas as pl
from jax.experimental.pallas import tpu as pltpu


_LANE = 128
_SUBLANE = 8


def _reconstructor_kernel(sig_ref, plen_ref, out_ref):
    """Compose [zeros(dim) | signatures | path_lengths] in registers, single store."""
    tb = out_ref.shape[0]
    zdim = out_ref.shape[1] - sig_ref.shape[1] - plen_ref.shape[1]   # == dim
    zeros = jnp.zeros((tb, zdim), dtype=out_ref.dtype)
    # One full-width store per output vreg (vs. three masked sub-range stores before).
    out_ref[...] = jnp.concatenate([zeros, sig_ref[...], plen_ref[...]], axis=1)


def _round_up(x, m):
    return ((x + m - 1) // m) * m


def _padded_row_bytes(cols, dtype_bytes):
    # A (tile_b, cols) VMEM block is padded to (tile_b, ceil(cols/128)*128) lanes.
    return _round_up(max(cols, 1), _LANE) * dtype_bytes


def _vmem_footprint_bytes(tile_b, col_list, dtype_bytes, buffer_count=2):
    """Padded, double-buffered VMEM footprint of all operands for a batch tile."""
    tb = _round_up(max(tile_b, 1), _SUBLANE)
    return buffer_count * tb * sum(_padded_row_bytes(c, dtype_bytes) for c in col_list)


def _pick_tile_b(batch, sig_cols, plen_cols, out_cols, dtype_bytes, max_tile_b=None):
    """Batch tile: multiple of 8, padded double-buffered footprint <= ~12 MiB
    (fits v5e's 16 MiB default scoped VMEM; far under v6e/v7x defaults)."""
    budget = 12 * 1024 * 1024
    per_row = _vmem_footprint_bytes(_SUBLANE, [sig_cols, plen_cols, out_cols],
                                    dtype_bytes) // _SUBLANE
    tile = max(_SUBLANE, (budget // max(per_row, 1)) // _SUBLANE * _SUBLANE)
    tile = min(tile, 8192)                     # amortizes per-grid-step overhead well
    if max_tile_b is not None:
        tile = min(tile, max(_SUBLANE, (max_tile_b // _SUBLANE) * _SUBLANE))
    if tile >= batch:
        if batch >= 2 * _SUBLANE:
            # >= 2 blocks so the "parallel" axis can shard across both v7x TensorCores.
            tile = _round_up(pl.cdiv(batch, 2), _SUBLANE)
        else:
            # Single block: block dim == full array dim is always legal.
            tile = batch
    return tile


def base_reconstructor_forward(signatures, path_lengths, *, path_length, dim,
                               max_tile_b=None):
    """JAX/Pallas equivalent of Base_Reconstructor.forward (empty nn.Sequential == identity)."""
    B, S = signatures.shape
    P = path_lengths.shape[1]
    n_steps = path_length - 1                    # == self.path_length in the PyTorch module
    assert S + P == n_steps * dim, (
        "cat([signatures, path_lengths], 1) must reshape to (B, path_length-1, dim)")
    assert path_lengths.shape[0] == B
    assert path_lengths.dtype == signatures.dtype

    out_cols = (n_steps + 1) * dim               # zero row prepended -> path_length rows
    dtype_bytes = signatures.dtype.itemsize

    tile_b = _pick_tile_b(B, S, P, out_cols, dtype_bytes, max_tile_b)
    grid = (pl.cdiv(B, tile_b),)

    # Explicit scoped-VMEM limit from the real padded/double-buffered footprint
    # (+ headroom for compiler-internal scratch); always <= 32 MiB.
    footprint = _vmem_footprint_bytes(tile_b, [S, P, out_cols], dtype_bytes)
    vmem_limit = int(min(footprint + (4 << 20), 32 << 20))

    out_flat = pl.pallas_call(
        _reconstructor_kernel,
        out_shape=jax.ShapeDtypeStruct((B, out_cols), signatures.dtype),
        grid=grid,
        in_specs=[
            pl.BlockSpec((tile_b, S), lambda i: (i, 0)),
            pl.BlockSpec((tile_b, P), lambda i: (i, 0)),
        ],
        out_specs=pl.BlockSpec((tile_b, out_cols), lambda i: (i, 0)),
        compiler_params=pltpu.CompilerParams(
            dimension_semantics=("parallel",),   # batch tiles are independent
            vmem_limit_bytes=vmem_limit),
    )(signatures, path_lengths)

    # Glue: pure metadata reshape back to (B, path_length, dim).
    return out_flat.reshape(B, n_steps + 1, dim)


def _reference(signatures, path_lengths, path_length, dim):
    """Pure-JAX mirror of the PyTorch forward."""
    B = signatures.shape[0]
    x = jnp.concatenate([signatures, path_lengths], axis=1)
    x = x.reshape(B, path_length - 1, dim)
    return jnp.concatenate([jnp.zeros((B, 1, dim), x.dtype), x], axis=1)


if __name__ == "__main__":
    key = jax.random.PRNGKey(0)

    # Shapes consistent with the module:
    #   sig_dim (== self.dim) = 4, constructor path_length = 9 -> self.path_length = 8
    #   signatures has 31 features, path_lengths has 1 -> 32 == 8 * 4
    sig_dim = 4
    path_length = 9
    n_steps = path_length - 1
    sig_feat = n_steps * sig_dim - 1             # 31
    plen_feat = 1

    # --- Test 1: tiny batch (single block, block == full batch dim) ---
    B = 2
    k1, k2 = jax.random.split(key)
    signatures = jax.random.normal(k1, (B, sig_feat), dtype=jnp.float32)
    path_lengths = jax.random.normal(k2, (B, plen_feat), dtype=jnp.float32)

    out = base_reconstructor_forward(
        signatures, path_lengths, path_length=path_length, dim=sig_dim)
    out = jax.block_until_ready(out)
    ref = _reference(signatures, path_lengths, path_length, sig_dim)
    assert out.shape == (B, path_length, sig_dim), out.shape
    assert jnp.allclose(out, ref), "mismatch vs reference (B=2)"

    # --- Test 2: multi-block grid with a partial trailing block (B=20, TILE_B=8) ---
    B2 = 20
    k3, k4 = jax.random.split(k2)
    signatures2 = jax.random.normal(k3, (B2, sig_feat), dtype=jnp.float32)
    path_lengths2 = jax.random.normal(k4, (B2, plen_feat), dtype=jnp.float32)

    out2 = base_reconstructor_forward(
        signatures2, path_lengths2, path_length=path_length, dim=sig_dim,
        max_tile_b=8)                             # force 3 grid steps, last one partial
    out2 = jax.block_until_ready(out2)
    ref2 = _reference(signatures2, path_lengths2, path_length, sig_dim)
    assert out2.shape == (B2, path_length, sig_dim), out2.shape
    assert jnp.allclose(out2, ref2), "mismatch vs reference (B=20, tiled)"

    # --- Test 3: batch large enough to trigger the >=2-block megacore split path ---
    B3 = 32
    k5, k6 = jax.random.split(k4)
    signatures3 = jax.random.normal(k5, (B3, sig_feat), dtype=jnp.float32)
    path_lengths3 = jax.random.normal(k6, (B3, plen_feat), dtype=jnp.float32)

    out3 = base_reconstructor_forward(
        signatures3, path_lengths3, path_length=path_length, dim=sig_dim)
    out3 = jax.block_until_ready(out3)
    ref3 = _reference(signatures3, path_lengths3, path_length, sig_dim)
    assert out3.shape == (B3, path_length, sig_dim), out3.shape
    assert jnp.allclose(out3, ref3), "mismatch vs reference (B=32, 2 blocks)"

    print("KERNEL_OK")
</pallas_src>

<mosaic_0001>
module attributes {stable_mosaic.version = 11 : i64} {
  func.func @_reconstructor_kernel(%arg0: i32, %arg1: memref<2x31xf32, #tpu.memory_space<vmem>>, %arg2: memref<2x1xf32, #tpu.memory_space<vmem>>, %arg3: memref<2x36xf32, #tpu.memory_space<vmem>>) attributes {dimension_semantics = [#tpu.dimension_semantics<parallel>], iteration_bounds = array<i64: 1>, scalar_prefetch = 0 : i64, scratch_operands = 0 : i64, tpu.core_type = #tpu.core_type<tc>, window_params = [{transform_indices = @transform_0, window_bounds = array<i64: 2, 31>}, {transform_indices = @transform_1, window_bounds = array<i64: 2, 1>}, {transform_indices = @transform_2, window_bounds = array<i64: 2, 36>}]} {
    %cst = arith.constant 0.000000e+00 : f32
    %0 = vector.broadcast %cst : f32 to vector<2x4xf32>
    %c0 = arith.constant 0 : index
    %c0_0 = arith.constant 0 : index
    %1 = vector.load %arg1[%c0, %c0_0] : memref<2x31xf32, #tpu.memory_space<vmem>>, vector<2x31xf32>
    %c0_1 = arith.constant 0 : index
    %c0_2 = arith.constant 0 : index
    %2 = vector.load %arg2[%c0_1, %c0_2] : memref<2x1xf32, #tpu.memory_space<vmem>>, vector<2x1xf32>
    %3 = tpu.concatenate %0, %1, %2 in 1 : vector<2x4xf32>, vector<2x31xf32>, vector<2x1xf32> -> vector<2x36xf32>
    %c0_3 = arith.constant 0 : index
    %c0_4 = arith.constant 0 : index
    %4 = vector.load %arg3[%c0_3, %c0_4] : memref<2x36xf32, #tpu.memory_space<vmem>>, vector<2x36xf32>
    tpu.vector_store %arg3[%c0_3, %c0_4], %3 {strides = array<i32>} : memref<2x36xf32, #tpu.memory_space<vmem>>, vector<2x36xf32>,
    return
  }
  func.func @transform_0(%arg0: i32) -> (i32, i32) {
    %c0_i32 = arith.constant 0 : i32
    %c0_i32_0 = arith.constant 0 : i32
    return %arg0, %c0_i32 : i32, i32
  }
  func.func @transform_1(%arg0: i32) -> (i32, i32) {
    %c0_i32 = arith.constant 0 : i32
    %c0_i32_0 = arith.constant 0 : i32
    return %arg0, %c0_i32 : i32, i32
  }
  func.func @transform_2(%arg0: i32) -> (i32, i32) {
    %c0_i32 = arith.constant 0 : i32
    %c0_i32_0 = arith.constant 0 : i32
    return %arg0, %c0_i32 : i32, i32
  }
}

</mosaic_0001>

<llo_original>
// kernel: tpu_custom_call.1
$region0: #{tpu_custom_call.1}
  #allocation0 [shape = 'u32[]', space=smem, size = 0x4, offset = 0x4, fixed_abs, tag = 'smem constant byte address 0x4 - core index']
  #allocation1 [shape = 'u32[144,128]{1,0:T(1,128)}', space=vmem, size = 0x12000, scoped, tag = 'internal scratch']
  %s0 = inlined_call_operand.vmem [shape: f32[2,31], index: 0, kind: input, shape index: {}]
  %s1 = inlined_call_operand.vmem [shape: f32[2,1], index: 1, kind: input, shape index: {}]
  %s2 = inlined_call_operand.hbm [shape: f32[2,36], index: 2, kind: output, shape index: {}]
  %s3 = sld [smem:[#allocation0]]
  $region18: #{tpu_custom_call.1} parent=0
    _
  %s5 = ssub.s32 1, %s3
  %s6 = scalar_select 0, %s5, %s3
  $region1: #{tpu_custom_call.1} parent=0
    #allocation2 [shape = 'u8[1024]{0}', space=vmem, size = 0x400, scoped, tag = 'output window, operand 0, single buffered']
    #allocation3 [shape = 's32[1]{0}', space=sflag, size = 0x4, scoped, tag = 'scoped memory for tpu_custom_call.1']
    %7 = vsyncpa [#allocation3], 0
    // Predicated region
    $region2: #{tpu_custom_call.1} parent=1 // pred_check
      _
    $region3: #{tpu_custom_call.1} parent=1 // pred_check_branch
      %9 = sbr.rel (0) target = $region5
    $region4: #{tpu_custom_call.1} parent=1 // pred_region
      _
    $region5: #{tpu_custom_call.1} parent=1 // pred_fallthru
      _
    // Predicated region
    $region6: #{tpu_custom_call.1} parent=1 // pred_check
      _
    $region7: #{tpu_custom_call.1} parent=1 // pred_check_branch
      %11 = sbr.rel (0) target = $region9
    $region8: #{tpu_custom_call.1} parent=1 // pred_region
      _
    $region9: #{tpu_custom_call.1} parent=1 // pred_fallthru
      _
    %v12 = vld [vmem:[%s0] sm:$0x3]
    %v13 = vld [vmem:[%s1] sm:$0x3]
    %15 = vrot.lane.b32.xlu0 %v12, 4
    %v16 = vpop.permute.xlu0 %15
    %19 = vrot.lane.b32.xlu0 %v13, 35
    %v20 = vpop.permute.xlu0 %19
    %vm22 = vcmask 31744
    %v23 = vsel %vm22, 0.0, %v16
    %vm24 = vcmask 285696
    %v25 = vsel %vm24, %v23, %v20
    %vm26 = vcmask 287744
    %27 = vst.msk [vmem:[#allocation2] sm:$0x3] %vm26, %v25
    // Predicated region
    $region10: #{tpu_custom_call.1} parent=1 // pred_check
      _
    $region11: #{tpu_custom_call.1} parent=1 // pred_check_branch
      %29 = sbr.rel (0) target = $region13
    $region12: #{tpu_custom_call.1} parent=1 // pred_region
      %s31 = ssub.s32 32, 32
      %32 = vsyncadd [#allocation3], %s31
      %s34 = sshll.u32 [#allocation2], 4
      %s35 = int_to_ptr.vmem [resolvable:$true] %s34
      %37 = dma.vmem_to_hbm [thread:$0]  %s35, 32, %s2, [#allocation3]
    $region13: #{tpu_custom_call.1} parent=1 // pred_fallthru
      _
    // Predicated region
    $region14: #{tpu_custom_call.1} parent=1 // pred_check
      _
    $region15: #{tpu_custom_call.1} parent=1 // pred_check_branch
      %39 = sbr.rel (0) target = $region17
    $region16: #{tpu_custom_call.1} parent=1 // pred_region
      %40 = dma.done [#allocation3], 32
    $region17: #{tpu_custom_call.1} parent=1 // pred_fallthru
      _
    %41 = vsyncpa [#allocation3], 1

</llo_original>
